<compile_context>
chip_gen: v5e
topology: v5e:2x2
jax: 0.10.0
libtpu: 0.0.40
codegen_flags: <defaults>
</compile_context>

<pallas_src>
import functools

import jax
import jax.numpy as jnp
from jax.experimental import pallas as pl
from jax.experimental.pallas import tpu as pltpu

LEAKY_SLOPE = 0.01  # nn.LeakyReLU default negative_slope
LANE = 128


def _round_up(n, m):
    return pl.cdiv(n, m) * m


def _pad2(a, rows, cols):
    return jnp.pad(a, ((0, rows - a.shape[0]), (0, cols - a.shape[1])))


def _vmem_capacity_bytes():
    # Trace-time hardware query; fall back to the smallest per-core VMEM (v7x: 64 MiB).
    try:
        return int(pltpu.get_tpu_info().vmem_capacity_bytes)
    except Exception:
        return 64 << 20


def _pick_batch_tile(batch):
    bt = min(256, _round_up(batch, 8))
    # Prefer >= 4 batch steps when the batch allows it so the x-tile DMA and output
    # writeback overlap with compute (and both v7x TensorCores see several tiles).
    while bt > 64 and pl.cdiv(batch, bt) < 4:
        bt //= 2
    return max(bt, 8)


def _analyzer_kernel(in_dim, x_ref, w_ref, b_ref, wl_ref, bl_ref, o_ref, h_ref):
    """Grid = (batch_tiles, deep); the layer axis is the carried ('arbitrary') axis.

    x_ref : (bt, in_dim)          unpadded input tile (lane padding happens in VMEM)
    w_ref : (1, in_pad, in_pad)   residual weight of layer k (streamed per grid step)
    b_ref : (1, 1, in_pad)        residual bias of layer k (f32)
    wl_ref: (in_pad, out_pad)     final linear weight (grid-constant)
    bl_ref: (1, out_pad)          final linear bias (f32)
    o_ref : (bt, out_pad)         lane-dense output tile
    h_ref : (bt, in_pad) f32      activation carried across layer steps
    """
    k = pl.program_id(1)

    @pl.when(k == 0)
    def _init_h():
        if in_dim < h_ref.shape[-1]:
            h_ref[...] = jnp.zeros_like(h_ref)          # padded lanes stay exactly 0
        h_ref[:, :in_dim] = x_ref[...].astype(jnp.float32)

    w = w_ref[0]                                         # (in_pad, in_pad)  MXU dtype
    b = b_ref[0]                                         # (1, in_pad)       f32
    h = h_ref[...]                                       # (bt, in_pad)      f32
    z = jnp.dot(h.astype(w.dtype), w, preferred_element_type=jnp.float32) + b
    h = h + jnp.maximum(z, LEAKY_SLOPE * z)              # LeakyReLU residual, f32
    h_ref[...] = h

    @pl.when(k == pl.num_programs(1) - 1)
    def _final_linear():
        wl = wl_ref[...]                                 # (in_pad, out_pad)
        out = jnp.dot(h.astype(wl.dtype), wl,
                      preferred_element_type=jnp.float32) + bl_ref[...]
        o_ref[...] = out.astype(o_ref.dtype)


def prepare_params(params, *, mxu_dtype=jnp.bfloat16):
    """Pad / stack / cast parameters ONCE (hoisted out of the forward path).

    Zero padding is mathematically inert: padded weight rows/cols and bias entries are
    0, so padded activation lanes stay exactly 0 through the residual blocks.
    """
    deep = len(params["w_res"])
    assert deep >= 1, "FcZero requires at least one residual block"
    in_dim, out_dim = params["w_lin"].shape
    in_pad = _round_up(max(in_dim, LANE), LANE)
    out_pad = _round_up(max(out_dim, LANE), LANE)
    # TODO(synk): if in_dim/out_dim ever grow enough to need K/N feature tiling, use
    # 256-wide N tiles on v6e/v7x (256x256 MXU); at these sizes a single 128 tile fits.
    w_res = jnp.stack([_pad2(w, in_pad, in_pad) for w in params["w_res"]]).astype(mxu_dtype)
    b_res = jnp.stack([_pad2(b, 1, in_pad) for b in params["b_res"]]).astype(jnp.float32)
    w_lin = _pad2(params["w_lin"], in_pad, out_pad).astype(mxu_dtype)
    b_lin = _pad2(params["b_lin"], 1, out_pad).astype(jnp.float32)
    return dict(w_res=w_res, b_res=b_res, w_lin=w_lin, b_lin=b_lin,
                in_dim=int(in_dim), out_dim=int(out_dim), deep=int(deep))


@functools.partial(jax.jit, static_argnames=("in_dim", "out_dim", "deep"))
def _analyzer_forward_impl(x, w_res, b_res, w_lin, b_lin, *, in_dim, out_dim, deep):
    B = x.shape[0]
    in_pad = w_res.shape[-1]
    out_pad = w_lin.shape[-1]

    bt = _pick_batch_tile(B)
    Bp = _round_up(B, bt)
    if Bp != B:                                   # batch-only pad; features stay unpadded
        x = jnp.pad(x, ((0, Bp - B), (0, 0)))
    nb = Bp // bt

    # VMEM budget: double-buffered I/O tiles + the streamed per-layer weight tile (x2)
    # + grid-constant final-linear params (x2) + f32 activation scratch + temporaries.
    mxu_bytes = w_res.dtype.itemsize
    vmem_needed = (
        2 * (bt * in_dim * x.dtype.itemsize + bt * out_pad * x.dtype.itemsize)
        + 2 * (in_pad * in_pad * mxu_bytes + in_pad * 4)
        + 2 * (in_pad * out_pad * mxu_bytes + out_pad * 4)
        + bt * in_pad * 4
        + 6 * bt * in_pad * 4
        + (4 << 20))
    vmem_limit = int(min(max(vmem_needed, 32 << 20), _vmem_capacity_bytes() - (8 << 20)))
    vmem_limit = max(vmem_limit, 16 << 20)

    cost = pl.CostEstimate(
        flops=int(2 * Bp * in_pad * in_pad * deep + 2 * Bp * in_pad * out_pad),
        transcendentals=0,
        bytes_accessed=int(x.size * x.dtype.itemsize
                           + w_res.size * mxu_bytes + b_res.size * 4
                           + w_lin.size * mxu_bytes + b_lin.size * 4
                           + Bp * out_pad * x.dtype.itemsize),
    )

    out = pl.pallas_call(
        functools.partial(_analyzer_kernel, in_dim),
        out_shape=jax.ShapeDtypeStruct((Bp, out_pad), x.dtype),
        grid=(nb, deep),
        in_specs=[
            pl.BlockSpec((bt, in_dim), lambda i, k: (i, 0)),            # x, no lane pad in HBM
            pl.BlockSpec((1, in_pad, in_pad), lambda i, k: (k, 0, 0)),  # w_res: streamed per layer
            pl.BlockSpec((1, 1, in_pad), lambda i, k: (k, 0, 0)),       # b_res: streamed per layer
            pl.BlockSpec((in_pad, out_pad), lambda i, k: (0, 0)),       # w_lin (grid-constant)
            pl.BlockSpec((1, out_pad), lambda i, k: (0, 0)),            # b_lin (grid-constant)
        ],
        out_specs=pl.BlockSpec((bt, out_pad), lambda i, k: (i, 0)),
        scratch_shapes=[pltpu.VMEM((bt, in_pad), jnp.float32)],         # carried activation h
        compiler_params=pltpu.CompilerParams(
            dimension_semantics=("parallel", "arbitrary"),
            vmem_limit_bytes=vmem_limit,
        ),
        cost_estimate=cost,
    )(x, w_res, b_res, w_lin, b_lin)

    return out[:B, :out_dim]


def analyzer_forward(x, prepared):
    """x: (B, in_dim) -> (B, out_dim); matches Analyzer.forward (FcZeroLin)."""
    return _analyzer_forward_impl(
        x, prepared["w_res"], prepared["b_res"], prepared["w_lin"], prepared["b_lin"],
        in_dim=prepared["in_dim"], out_dim=prepared["out_dim"], deep=prepared["deep"])


def init_params(key, in_dim, out_dim, deep):
    """Deterministic synthetic init (shapes match nn.Linear; weights stored transposed)."""
    keys = jax.random.split(key, 2 * deep + 2)
    w_res, b_res = [], []
    for i in range(deep):
        w_res.append(jax.random.normal(keys[2 * i], (in_dim, in_dim), jnp.float32) * 0.1)
        b_res.append(jax.random.normal(keys[2 * i + 1], (1, in_dim), jnp.float32) * 0.1)
    w_lin = jax.random.normal(keys[-2], (in_dim, out_dim), jnp.float32) * 0.1
    b_lin = jax.random.normal(keys[-1], (1, out_dim), jnp.float32) * 0.1
    return {"w_res": w_res, "b_res": b_res, "w_lin": w_lin, "b_lin": b_lin}


def analyzer_reference(x, params):
    """Plain-JAX f32 reference of FcZeroLin forward (for correctness check)."""
    h = x
    for w, b in zip(params["w_res"], params["b_res"]):
        z = h @ w + b
        h = h + jnp.where(z >= 0, z, LEAKY_SLOPE * z)
    return h @ params["w_lin"] + params["b_lin"]


if __name__ == "__main__":
    key = jax.random.PRNGKey(0)

    # Module defaults: in_dim=6, out_dim=4, deep=1.
    in_dim, out_dim, deep = 6, 4, 1
    batch = 512                    # adaptive tile -> 4 batch tiles of 128 (pipelined)
    kx, kp, kp2 = jax.random.split(key, 3)
    x = jax.random.normal(kx, (batch, in_dim), jnp.float32)
    params = init_params(kp, in_dim, out_dim, deep)
    ref = analyzer_reference(x, params)

    # f32 MXU path: strict check against the plain-JAX reference.
    prep_f32 = prepare_params(params, mxu_dtype=jnp.float32)
    out_f32 = jax.block_until_ready(analyzer_forward(x, prep_f32))
    assert out_f32.shape == (batch, out_dim)
    assert jnp.allclose(out_f32, ref, atol=2e-4, rtol=2e-4)

    # bf16 MXU fast path (f32 accumulate / residual): loose tolerance vs f32 reference.
    prep_bf16 = prepare_params(params)
    out_bf16 = jax.block_until_ready(analyzer_forward(x, prep_bf16))
    assert out_bf16.shape == (batch, out_dim)
    assert jnp.allclose(out_bf16, ref, atol=5e-2, rtol=5e-2)

    # Deeper config + uneven batch: exercises the streamed layer axis and batch padding.
    deep2 = 3
    params2 = init_params(kp2, in_dim, out_dim, deep2)
    x2 = x[:70]
    ref2 = analyzer_reference(x2, params2)
    out2 = jax.block_until_ready(
        analyzer_forward(x2, prepare_params(params2, mxu_dtype=jnp.float32)))
    assert out2.shape == (70, out_dim)
    assert jnp.allclose(out2, ref2, atol=1e-3, rtol=1e-3)

    print("KERNEL_OK")
</pallas_src>

<mosaic_0001>
module attributes {stable_mosaic.version = 11 : i64} {
  func.func @_analyzer_kernel(%arg0: i32, %arg1: i32, %arg2: memref<128x6xf32, #tpu.memory_space<vmem>>, %arg3: memref<1x128x128xf32, #tpu.memory_space<vmem>>, %arg4: memref<1x1x128xf32, #tpu.memory_space<vmem>>, %arg5: memref<128x128xf32, #tpu.memory_space<vmem>>, %arg6: memref<1x128xf32, #tpu.memory_space<vmem>>, %arg7: memref<128x128xf32, #tpu.memory_space<vmem>>, %arg8: memref<128x128xf32, #tpu.memory_space<vmem>>) attributes {dimension_semantics = [#tpu.dimension_semantics<parallel>, #tpu.dimension_semantics<arbitrary>], iteration_bounds = array<i64: 4, 1>, scalar_prefetch = 0 : i64, scratch_operands = 1 : i64, tpu.core_type = #tpu.core_type<tc>, window_params = [{transform_indices = @transform_0, window_bounds = array<i64: 128, 6>}, {transform_indices = @transform_1, window_bounds = array<i64: 1, 128, 128>}, {transform_indices = @transform_2, window_bounds = array<i64: 1, 1, 128>}, {pipeline_mode = #tpu.pipeline_mode<synchronous>, transform_indices = @transform_3, window_bounds = array<i64: 128, 128>}, {pipeline_mode = #tpu.pipeline_mode<synchronous>, transform_indices = @transform_4, window_bounds = array<i64: 1, 128>}, {transform_indices = @transform_5, window_bounds = array<i64: 128, 128>}]} {
    %c0_i32 = arith.constant 0 : i32
    %0 = arith.cmpi eq, %arg1, %c0_i32 : i32
    %1 = arith.extui %0 : i1 to i32
    %c0_i32_0 = arith.constant 0 : i32
    %2 = arith.cmpi ne, %1, %c0_i32_0 : i32
    scf.if %2 {
      %cst_13 = arith.constant 0.000000e+00 : f32
      %19 = vector.broadcast %cst_13 : f32 to vector<128x128xf32>
      %c0_14 = arith.constant 0 : index
      %c0_15 = arith.constant 0 : index
      %20 = vector.load %arg8[%c0_14, %c0_15] : memref<128x128xf32, #tpu.memory_space<vmem>>, vector<128x128xf32>
      tpu.vector_store %arg8[%c0_14, %c0_15], %19 {strides = array<i32>} : memref<128x128xf32, #tpu.memory_space<vmem>>, vector<128x128xf32>,
      %c0_16 = arith.constant 0 : index
      %c0_17 = arith.constant 0 : index
      %21 = vector.load %arg2[%c0_16, %c0_17] : memref<128x6xf32, #tpu.memory_space<vmem>>, vector<128x6xf32>
      %c0_18 = arith.constant 0 : index
      %c0_19 = arith.constant 0 : index
      %22 = vector.load %arg8[%c0_18, %c0_19] : memref<128x128xf32, #tpu.memory_space<vmem>>, vector<128x6xf32>
      tpu.vector_store %arg8[%c0_18, %c0_19], %21 {strides = array<i32>} : memref<128x128xf32, #tpu.memory_space<vmem>>, vector<128x6xf32>,
    } else {
    }
    %c0 = arith.constant 0 : index
    %c0_1 = arith.constant 0 : index
    %c0_2 = arith.constant 0 : index
    %3 = vector.load %arg3[%c0, %c0_1, %c0_2] : memref<1x128x128xf32, #tpu.memory_space<vmem>>, vector<1x128x128xf32>
    %4 = vector.shape_cast %3 : vector<1x128x128xf32> to vector<128x128xf32>
    %c0_3 = arith.constant 0 : index
    %c0_4 = arith.constant 0 : index
    %c0_5 = arith.constant 0 : index
    %5 = vector.load %arg4[%c0_3, %c0_4, %c0_5] : memref<1x1x128xf32, #tpu.memory_space<vmem>>, vector<1x1x128xf32>
    %6 = vector.shape_cast %5 : vector<1x1x128xf32> to vector<1x128xf32>
    %c0_6 = arith.constant 0 : index
    %c0_7 = arith.constant 0 : index
    %7 = vector.load %arg8[%c0_6, %c0_7] : memref<128x128xf32, #tpu.memory_space<vmem>>, vector<128x128xf32>
    %cst = arith.constant dense<0.000000e+00> : vector<128x128xf32>
    %8 = tpu.matmul %7, %4, %cst {dimension_numbers = #tpu.dot_dimension_numbers<[1], [0], [0], [1], [0, 0, 1, 1], [], []>} : vector<128x128xf32>, vector<128x128xf32>, vector<128x128xf32> -> vector<128x128xf32>
    %9 = vector.broadcast %6 : vector<1x128xf32> to vector<128x128xf32>
    %10 = arith.addf %8, %9 : vector<128x128xf32>
    %cst_8 = arith.constant 0.00999999977 : f32
    %11 = vector.broadcast %cst_8 : f32 to vector<128x128xf32>
    %12 = arith.mulf %11, %10 : vector<128x128xf32>
    %13 = arith.maximumf %10, %12 : vector<128x128xf32>
    %14 = arith.addf %7, %13 : vector<128x128xf32>
    %c0_9 = arith.constant 0 : index
    %c0_10 = arith.constant 0 : index
    %15 = vector.load %arg8[%c0_9, %c0_10] : memref<128x128xf32, #tpu.memory_space<vmem>>, vector<128x128xf32>
    tpu.vector_store %arg8[%c0_9, %c0_10], %14 {strides = array<i32>} : memref<128x128xf32, #tpu.memory_space<vmem>>, vector<128x128xf32>,
    %c0_i32_11 = arith.constant 0 : i32
    %16 = arith.cmpi eq, %arg1, %c0_i32_11 : i32
    %17 = arith.extui %16 : i1 to i32
    %c0_i32_12 = arith.constant 0 : i32
    %18 = arith.cmpi ne, %17, %c0_i32_12 : i32
    scf.if %18 {
      %c0_13 = arith.constant 0 : index
      %c0_14 = arith.constant 0 : index
      %19 = vector.load %arg5[%c0_13, %c0_14] : memref<128x128xf32, #tpu.memory_space<vmem>>, vector<128x128xf32>
      %cst_15 = arith.constant dense<0.000000e+00> : vector<128x128xf32>
      %20 = tpu.matmul %14, %19, %cst_15 {dimension_numbers = #tpu.dot_dimension_numbers<[1], [0], [0], [1], [0, 0, 1, 1], [], []>} : vector<128x128xf32>, vector<128x128xf32>, vector<128x128xf32> -> vector<128x128xf32>
      %c0_16 = arith.constant 0 : index
      %c0_17 = arith.constant 0 : index
      %21 = vector.load %arg6[%c0_16, %c0_17] : memref<1x128xf32, #tpu.memory_space<vmem>>, vector<1x128xf32>
      %22 = vector.broadcast %21 : vector<1x128xf32> to vector<128x128xf32>
      %23 = arith.addf %20, %22 : vector<128x128xf32>
      %c0_18 = arith.constant 0 : index
      %c0_19 = arith.constant 0 : index
      %24 = vector.load %arg7[%c0_18, %c0_19] : memref<128x128xf32, #tpu.memory_space<vmem>>, vector<128x128xf32>
      tpu.vector_store %arg7[%c0_18, %c0_19], %23 {strides = array<i32>} : memref<128x128xf32, #tpu.memory_space<vmem>>, vector<128x128xf32>,
    } else {
    }
    return
  }
  func.func @transform_0(%arg0: i32, %arg1: i32) -> (i32, i32) {
    %c0_i32 = arith.constant 0 : i32
    %c0_i32_0 = arith.constant 0 : i32
    return %arg0, %c0_i32 : i32, i32
  }
  func.func @transform_1(%arg0: i32, %arg1: i32) -> (i32, i32, i32) {
    %c0_i32 = arith.constant 0 : i32
    %c0_i32_0 = arith.constant 0 : i32
    %c0_i32_1 = arith.constant 0 : i32
    return %arg1, %c0_i32, %c0_i32_0 : i32, i32, i32
  }
  func.func @transform_2(%arg0: i32, %arg1: i32) -> (i32, i32, i32) {
    %c0_i32 = arith.constant 0 : i32
    %c0_i32_0 = arith.constant 0 : i32
    %c0_i32_1 = arith.constant 0 : i32
    return %arg1, %c0_i32, %c0_i32_0 : i32, i32, i32
  }
  func.func @transform_3(%arg0: i32, %arg1: i32) -> (i32, i32) {
    %c0_i32 = arith.constant 0 : i32
    %c0_i32_0 = arith.constant 0 : i32
    %c0_i32_1 = arith.constant 0 : i32
    return %c0_i32, %c0_i32_0 : i32, i32
  }
  func.func @transform_4(%arg0: i32, %arg1: i32) -> (i32, i32) {
    %c0_i32 = arith.constant 0 : i32
    %c0_i32_0 = arith.constant 0 : i32
    %c0_i32_1 = arith.constant 0 : i32
    return %c0_i32, %c0_i32_0 : i32, i32
  }
  func.func @transform_5(%arg0: i32, %arg1: i32) -> (i32, i32) {
    %c0_i32 = arith.constant 0 : i32
    %c0_i32_0 = arith.constant 0 : i32
    return %arg0, %c0_i32 : i32, i32
  }
}

</mosaic_0001>

<llo_original>
// kernel: _analyzer_forward_impl.1
$region0: #{_analyzer_forward_impl.1}
  #allocation0 [shape = 'u32[]', space=smem, size = 0x4, offset = 0x4, fixed_abs, tag = 'smem constant byte address 0x4 - core index']
  #allocation1 [shape = 'u32[72,128]{1,0:T(1,128)}', space=vmem, size = 0x9000, scoped, tag = 'internal scratch']
  #allocation2 [shape = 'f32[128,128]{1,0:T(8,128)}', space=vmem, size = 0x10000, scoped, tag = 'scratch operand']
  %s0 = inlined_call_operand.vmem [shape: f32[512,6], index: 0, kind: input, shape index: {}]
  %s1 = inlined_call_operand.vmem [shape: f32[1,128,128], index: 1, kind: input, shape index: {}]
  %s2 = inlined_call_operand.vmem [shape: f32[1,1,128], index: 2, kind: input, shape index: {}]
  %s3 = inlined_call_operand.vmem [shape: f32[128,128], index: 3, kind: input, shape index: {}]
  %s4 = inlined_call_operand.vmem [shape: f32[1,128], index: 4, kind: input, shape index: {}]
  %s5 = inlined_call_operand.vmem [shape: f32[512,128], index: 5, kind: output, shape index: {}]
  %s6 = sld [smem:[#allocation0]]
  $region61: #{_analyzer_forward_impl.1} parent=0
    _
  %s8 = ssub.s32 1, %s6
  %s9 = scalar_select 0, %s8, %s6
  loop: start=0, step=1, limit=6
  $region2: #{_analyzer_forward_impl.1} parent=0 // loop_pre_header
    _
  $region3: #{_analyzer_forward_impl.1} parent=0 // loop_header
    %s11 = sphi 0, %s15
    %p12 = scmp.ge.s32.totalorder %s11, 6
    %s18 = sphi 0, %s30
    %s19 = sphi 0, %s26
    %s20 = sphi 0, %s18
    %s21 = sphi 0, %s19
    %s22 = sphi 0, %s20
    %s23 = sphi 0, %s21
    %s33 = sphi 0, %s35
    %s36 = sphi 0, %s33
    %s37 = sphi 0, %s36
    %s53 = sphi 0, %s37
    %s59 = sphi 0, %s61
    %s62 = sphi 0, %s59
    %s63 = sphi 0, %s62
    %s79 = sphi 0, %s63
    %s85 = sphi 0, %s87
    %s88 = sphi 0, %s85
    %s89 = sphi 0, %s88
    %s105 = sphi 0, %s89
    %s109 = sphi 0, %s109
    %s111 = sphi 0, %s109
    %s112 = sphi 0, %s111
    %s126 = sphi 0, %s112
    %s130 = sphi 0, %s130
    %s132 = sphi 0, %s130
    %s133 = sphi 0, %s132
    %s147 = sphi 0, %s133
    %s153 = sphi 0, %s155
    %s156 = sphi 0, %s153
    %s157 = sphi 0, %s156
    %s173 = sphi 0, %s157
  $region4: #{_analyzer_forward_impl.1} parent=0 // loop_header_branch
    %14 = sbr.rel (%p12) target = $region8
  $region5: #{_analyzer_forward_impl.1} parent=0 // loop_body
    %s16 = ssub.s32 %s11, 1
    %s17 = ssub.s32 %s11, 2
    %s24 = sadd.s32 1, %s19
    %p25 = scmp.ge.s32.totalorder %s24, 1
    %s26 = scalar_select %p25, 0, %s24
    %s27 = sadd.s32 1, %s18
    %s28 = scalar_select %p25, %s27, %s18
    %p29 = scmp.ge.s32.totalorder %s28, 4
    %s30 = scalar_select %p29, 0, %s28
    %s31 = ssub.s32 %s18, %s30
    %p32 = scmp.eq.s32.totalorder %s31, 0
    %s34 = sadd.s32 %s33, 1
    %s35 = scalar_select %p32, %s33, %s34
    %p38 = pneg %p32
    %p39 = scmp.eq.s32.totalorder %s11, 3
    %p40 = por %p38, %p39
    %p41 = scmp.ne.s32.totalorder %s33, %s36
    %p42 = scmp.eq.s32.totalorder %s11, 0
    %p43 = por %p41, %p42
    %p44 = scmp.ne.s32.totalorder %s33, %s36
    %p45 = scmp.eq.s32.totalorder %s16, 3
    %p46 = por %p44, %p45
    %p47 = scmp.ne.s32.totalorder %s36, %s37
    %p48 = scmp.eq.s32.totalorder %s16, 0
    %p49 = por %p47, %p48
    %p50 = scmp.ne.s32.totalorder %s36, %s37
    %p51 = scmp.eq.s32.totalorder %s17, 3
    %p52 = por %p50, %p51
    %p54 = scmp.ne.s32.totalorder %s37, %s53
    %p55 = scmp.eq.s32.totalorder %s17, 0
    %p56 = por %p54, %p55
    %s57 = ssub.s32 %s19, %s26
    %p58 = scmp.eq.s32.totalorder %s57, 0
    %s60 = sadd.s32 %s59, 1
    %s61 = scalar_select %p58, %s59, %s60
    %p64 = pneg %p58
    %p65 = scmp.eq.s32.totalorder %s11, 3
    %p66 = por %p64, %p65
    %p67 = scmp.ne.s32.totalorder %s59, %s62
    %p68 = scmp.eq.s32.totalorder %s11, 0
    %p69 = por %p67, %p68
    %p70 = scmp.ne.s32.totalorder %s59, %s62
    %p71 = scmp.eq.s32.totalorder %s16, 3
    %p72 = por %p70, %p71
    %p73 = scmp.ne.s32.totalorder %s62, %s63
    %p74 = scmp.eq.s32.totalorder %s16, 0
    %p75 = por %p73, %p74
    %p76 = scmp.ne.s32.totalorder %s62, %s63
    %p77 = scmp.eq.s32.totalorder %s17, 3
    %p78 = por %p76, %p77
    %p80 = scmp.ne.s32.totalorder %s63, %s79
    %p81 = scmp.eq.s32.totalorder %s17, 0
    %p82 = por %p80, %p81
    %s83 = ssub.s32 %s19, %s26
    %p84 = scmp.eq.s32.totalorder %s83, 0
    %s86 = sadd.s32 %s85, 1
    %s87 = scalar_select %p84, %s85, %s86
    %p90 = pneg %p84
    %p91 = scmp.eq.s32.totalorder %s11, 3
    %p92 = por %p90, %p91
    %p93 = scmp.ne.s32.totalorder %s85, %s88
    %p94 = scmp.eq.s32.totalorder %s11, 0
    %p95 = por %p93, %p94
    %p96 = scmp.ne.s32.totalorder %s85, %s88
    %p97 = scmp.eq.s32.totalorder %s16, 3
    %p98 = por %p96, %p97
    %p99 = scmp.ne.s32.totalorder %s88, %s89
    %p100 = scmp.eq.s32.totalorder %s16, 0
    %p101 = por %p99, %p100
    %p102 = scmp.ne.s32.totalorder %s88, %s89
    %p103 = scmp.eq.s32.totalorder %s17, 3
    %p104 = por %p102, %p103
    %p106 = scmp.ne.s32.totalorder %s89, %s105
    %p107 = scmp.eq.s32.totalorder %s17, 0
    %p108 = por %p106, %p107
    %s110 = sadd.s32 %s109, 1
    %p113 = scmp.eq.s32.totalorder %s11, 3
    %p114 = scmp.ne.s32.totalorder %s109, %s111
    %p115 = scmp.eq.s32.totalorder %s11, 0
    %p116 = por %p114, %p115
    %p117 = scmp.ne.s32.totalorder %s109, %s111
    %p118 = scmp.eq.s32.totalorder %s16, 3
    %p119 = por %p117, %p118
    %p120 = scmp.ne.s32.totalorder %s111, %s112
    %p121 = scmp.eq.s32.totalorder %s16, 0
    %p122 = por %p120, %p121
    %p123 = scmp.ne.s32.totalorder %s111, %s112
    %p124 = scmp.eq.s32.totalorder %s17, 3
    %p125 = por %p123, %p124
    %p127 = scmp.ne.s32.totalorder %s112, %s126
    %p128 = scmp.eq.s32.totalorder %s17, 0
    %p129 = por %p127, %p128
    %s131 = sadd.s32 %s130, 1
    %p134 = scmp.eq.s32.totalorder %s11, 3
    %p135 = scmp.ne.s32.totalorder %s130, %s132
    %p136 = scmp.eq.s32.totalorder %s11, 0
    %p137 = por %p135, %p136
    %p138 = scmp.ne.s32.totalorder %s130, %s132
    %p139 = scmp.eq.s32.totalorder %s16, 3
    %p140 = por %p138, %p139
    %p141 = scmp.ne.s32.totalorder %s132, %s133
    %p142 = scmp.eq.s32.totalorder %s16, 0
    %p143 = por %p141, %p142
    %p144 = scmp.ne.s32.totalorder %s132, %s133
    %p145 = scmp.eq.s32.totalorder %s17, 3
    %p146 = por %p144, %p145
    %p148 = scmp.ne.s32.totalorder %s133, %s147
    %p149 = scmp.eq.s32.totalorder %s17, 0
    %p150 = por %p148, %p149
    %s151 = ssub.s32 %s18, %s30
    %p152 = scmp.eq.s32.totalorder %s151, 0
    %s154 = sadd.s32 %s153, 1
    %s155 = scalar_select %p152, %s153, %s154
    %p158 = pneg %p152
    %p159 = scmp.eq.s32.totalorder %s11, 3
    %p160 = por %p158, %p159
    %p161 = scmp.ne.s32.totalorder %s153, %s156
    %p162 = scmp.eq.s32.totalorder %s11, 0
    %p163 = por %p161, %p162
    %p164 = scmp.ne.s32.totalorder %s153, %s156
    %p165 = scmp.eq.s32.totalorder %s16, 3
    %p166 = por %p164, %p165
    %p167 = scmp.ne.s32.totalorder %s156, %s157
    %p168 = scmp.eq.s32.totalorder %s16, 0
    %p169 = por %p167, %p168
    %p170 = scmp.ne.s32.totalorder %s156, %s157
    %p171 = scmp.eq.s32.totalorder %s17, 3
    %p172 = por %p170, %p171
    %p174 = scmp.ne.s32.totalorder %s157, %s173
    %p175 = scmp.eq.s32.totalorder %s17, 0
    %p176 = por %p174, %p175
    %p177 = scmp.le.s32.totalorder 1, %s11
    %p178 = scmp.lt.s32.totalorder %s11, 5
    %p179 = pnand %p177, %p178
    %p180 = pneg %p179
    // Predicated region
    $region9: #{_analyzer_forward_impl.1} parent=5 // pred_check
      _
    $region10: #{_analyzer_forward_impl.1} parent=5 // pred_check_branch
      %182 = sbr.rel (%p179) target = $region12
    $region11: #{_analyzer_forward_impl.1} parent=5 // pred_region
      %s183 = ssub.s32 %s11, 1
      // Predicated region
      $region13: #{_analyzer_forward_impl.1} parent=11 // pred_check
        %p184 = pneg %p75
      $region14: #{_analyzer_forward_impl.1} parent=11 // pred_check_branch
        %186 = sbr.rel (%p184) target = $region16
      $region15: #{_analyzer_forward_impl.1} parent=11 // pred_region
        %p187 = scmp.lt.s32.totalorder %s21, 0
        %s188 = scalar_select %p187, %s21, 0
        %s189 = smul.addr %s188, 16
        %s190 = smul.addr %s189, 8
        %s191 = scalar_lea.vmem %s1, %s190
      $region16: #{_analyzer_forward_impl.1} parent=11 // pred_fallthru
        _
      // Predicated region
      $region17: #{_analyzer_forward_impl.1} parent=11 // pred_check
        %p192 = pneg %p101
      $region18: #{_analyzer_forward_impl.1} parent=11 // pred_check_branch
        %194 = sbr.rel (%p192) target = $region20
      $region19: #{_analyzer_forward_impl.1} parent=11 // pred_region
        %p195 = scmp.lt.s32.totalorder %s21, 0
        %s196 = scalar_select %p195, %s21, 0
        %s197 = scalar_lea.vmem %s2, %s196
      $region20: #{_analyzer_forward_impl.1} parent=11 // pred_fallthru
        _
      // Predicated region
      $region21: #{_analyzer_forward_impl.1} parent=11 // pred_check
        %p198 = pneg %p122
      $region22: #{_analyzer_forward_impl.1} parent=11 // pred_check_branch
        %200 = sbr.rel (%p198) target = $region24
      $region23: #{_analyzer_forward_impl.1} parent=11 // pred_region
        _
      $region24: #{_analyzer_forward_impl.1} parent=11 // pred_fallthru
        _
      // Predicated region
      $region25: #{_analyzer_forward_impl.1} parent=11 // pred_check
        %p201 = pneg %p143
      $region26: #{_analyzer_forward_impl.1} parent=11 // pred_check_branch
        %203 = sbr.rel (%p201) target = $region28
      $region27: #{_analyzer_forward_impl.1} parent=11 // pred_region
        _
      $region28: #{_analyzer_forward_impl.1} parent=11 // pred_fallthru
        _
    $region12: #{_analyzer_forward_impl.1} parent=5 // pred_fallthru
      _
    %p204 = scmp.lt.s32.totalorder %s11, 4
    // Predicated region
    $region29: #{_analyzer_forward_impl.1} parent=5 // pred_check
      %p205 = pneg %p204
    $region30: #{_analyzer_forward_impl.1} parent=5 // pred_check_branch
      %207 = sbr.rel (%p205) target = $region32
    $region31: #{_analyzer_forward_impl.1} parent=5 // pred_region
      // Predicated region
      $region33: #{_analyzer_forward_impl.1} parent=31 // pred_check
        %p208 = pneg %p43
      $region34: #{_analyzer_forward_impl.1} parent=31 // pred_check_branch
        %210 = sbr.rel (%p208) target = $region36
      $region35: #{_analyzer_forward_impl.1} parent=31 // pred_region
        %s211 = smul.u32 16, %s18
        %p212 = scmp.lt.s32.totalorder %s211, 63
        %s213 = scalar_select %p212, %s211, 63
        %s214 = smul.addr %s213, 8
        %s215 = scalar_lea.vmem %s0, %s214
        %s216 = smul.u32 16, %s18
      $region36: #{_analyzer_forward_impl.1} parent=31 // pred_fallthru
        _
    $region32: #{_analyzer_forward_impl.1} parent=5 // pred_fallthru
      _
    %p217 = scmp.le.s32.totalorder 1, %s11
    %p218 = scmp.lt.s32.totalorder %s11, 5
    %p219 = pnand %p217, %p218
    %p220 = pneg %p219
    // Predicated region
    $region37: #{_analyzer_forward_impl.1} parent=5 // pred_check
      _
    $region38: #{_analyzer_forward_impl.1} parent=5 // pred_check_branch
      %222 = sbr.rel (%p219) target = $region40
    $region39: #{_analyzer_forward_impl.1} parent=5 // pred_region
      %s223 = ssub.s32 %s11, 1
      %s224 = smul.u32 16, %s20
      %p225 = scmp.lt.s32.totalorder %s224, 63
      %s226 = scalar_select %p225, %s224, 63
      %s227 = smul.addr %s226, 8
      %s228 = scalar_lea.vmem %s0, %s227
      %p229 = pneg %p49
      %p230 = pneg %p46
      %p231 = scmp.lt.s32.totalorder %s21, 0
      %s232 = scalar_select %p231, %s21, 0
      %s233 = smul.addr %s232, 16
      %s234 = smul.addr %s233, 8
      %s235 = scalar_lea.vmem %s1, %s234
      %p236 = pneg %p75
      %p237 = pneg %p72
      %p238 = scmp.lt.s32.totalorder %s21, 0
      %s239 = scalar_select %p238, %s21, 0
      %s240 = scalar_lea.vmem %s2, %s239
      %p241 = pneg %p101
      %p242 = pneg %p98
      %p243 = pneg %p122
      %p244 = pneg %p119
      %p245 = pneg %p143
      %p246 = pneg %p140
      %p247 = pneg %p169
      %p248 = pneg %p166
      %s249 = smul.u32 16, %s20
      %p250 = scmp.lt.s32.totalorder %s249, 63
      %s251 = scalar_select %p250, %s249, 63
      %s252 = smul.addr %s251, 8
      %s253 = scalar_lea.vmem %s5, %s252
      %s254 = smul.u32 16, %s20
      %p255 = scmp.lt.s32.totalorder %s254, 63
      %s256 = scalar_select %p255, %s254, 63
      %s257 = smul.addr %s256, 8
      %s258 = scalar_lea.vmem %s0, %s257
      %s259 = smul.u32 16, %s20
      %p260 = scmp.lt.s32.totalorder %s21, 0
      %s261 = scalar_select %p260, %s21, 0
      %s262 = smul.addr %s261, 16
      %s263 = smul.addr %s262, 8
      %s264 = scalar_lea.vmem %s1, %s263
      %p265 = scmp.lt.s32.totalorder %s21, 0
      %s266 = scalar_select %p265, %s21, 0
      %s267 = scalar_lea.vmem %s2, %s266
      %s268 = smul.u32 16, %s20
      %p269 = scmp.lt.s32.totalorder %s268, 63
      %s270 = scalar_select %p269, %s268, 63
      %s271 = smul.addr %s270, 8
      %s272 = scalar_lea.vmem %s5, %s271
      %s273 = smul.u32 16, %s20
      %p274 = scmp.eq.s32.totalorder %s21, 0
      // Predicated region
      $region41: #{_analyzer_forward_impl.1} parent=39 // pred_check
        %p275 = pneg %p274
      $region42: #{_analyzer_forward_impl.1} parent=39 // pred_check_branch
        %277 = sbr.rel (%p275) target = $region44
      $region43: #{_analyzer_forward_impl.1} parent=39 // pred_region
        %278 = vst [vmem:[#allocation2] sm:$0xff] 0.0
        %279 = vst [vmem:[#allocation2 + $0x8] sm:$0xff] 0.0
        %280 = vst [vmem:[#allocation2 + $0x10] sm:$0xff] 0.0
        %281 = vst [vmem:[#allocation2 + $0x18] sm:$0xff] 0.0
        %282 = vst [vmem:[#allocation2 + $0x20] sm:$0xff] 0.0
        %283 = vst [vmem:[#allocation2 + $0x28] sm:$0xff] 0.0
        %284 = vst [vmem:[#allocation2 + $0x30] sm:$0xff] 0.0
        %285 = vst [vmem:[#allocation2 + $0x38] sm:$0xff] 0.0
        %286 = vst [vmem:[#allocation2 + $0x40] sm:$0xff] 0.0
        %287 = vst [vmem:[#allocation2 + $0x48] sm:$0xff] 0.0
        %288 = vst [vmem:[#allocation2 + $0x50] sm:$0xff] 0.0
        %289 = vst [vmem:[#allocation2 + $0x58] sm:$0xff] 0.0
        %290 = vst [vmem:[#allocation2 + $0x60] sm:$0xff] 0.0
        %291 = vst [vmem:[#allocation2 + $0x68] sm:$0xff] 0.0
        %292 = vst [vmem:[#allocation2 + $0x70] sm:$0xff] 0.0
        %293 = vst [vmem:[#allocation2 + $0x78] sm:$0xff] 0.0
        %v294 = vld [vmem:[%s258] sm:$0xff]
        %v295 = vld [vmem:[%s258 + $0x8] sm:$0xff]
        %v296 = vld [vmem:[%s258 + $0x10] sm:$0xff]
        %v297 = vld [vmem:[%s258 + $0x18] sm:$0xff]
        %v298 = vld [vmem:[%s258 + $0x20] sm:$0xff]
        %v299 = vld [vmem:[%s258 + $0x28] sm:$0xff]
        %v300 = vld [vmem:[%s258 + $0x30] sm:$0xff]
        %v301 = vld [vmem:[%s258 + $0x38] sm:$0xff]
        %v302 = vld [vmem:[%s258 + $0x40] sm:$0xff]
        %v303 = vld [vmem:[%s258 + $0x48] sm:$0xff]
        %v304 = vld [vmem:[%s258 + $0x50] sm:$0xff]
        %v305 = vld [vmem:[%s258 + $0x58] sm:$0xff]
        %v306 = vld [vmem:[%s258 + $0x60] sm:$0xff]
        %v307 = vld [vmem:[%s258 + $0x68] sm:$0xff]
        %v308 = vld [vmem:[%s258 + $0x70] sm:$0xff]
        %v309 = vld [vmem:[%s258 + $0x78] sm:$0xff]
        %vm310 = vcmask 48128
        %311 = vst.msk [vmem:[#allocation2] sm:$0xff] %vm310, %v294
        %312 = vst.msk [vmem:[#allocation2 + $0x8] sm:$0xff] %vm310, %v295
        %313 = vst.msk [vmem:[#allocation2 + $0x10] sm:$0xff] %vm310, %v296
        %314 = vst.msk [vmem:[#allocation2 + $0x18] sm:$0xff] %vm310, %v297
        %315 = vst.msk [vmem:[#allocation2 + $0x20] sm:$0xff] %vm310, %v298
        %316 = vst.msk [vmem:[#allocation2 + $0x28] sm:$0xff] %vm310, %v299
        %317 = vst.msk [vmem:[#allocation2 + $0x30] sm:$0xff] %vm310, %v300
        %318 = vst.msk [vmem:[#allocation2 + $0x38] sm:$0xff] %vm310, %v301
        %319 = vst.msk [vmem:[#allocation2 + $0x40] sm:$0xff] %vm310, %v302
        %320 = vst.msk [vmem:[#allocation2 + $0x48] sm:$0xff] %vm310, %v303
        %321 = vst.msk [vmem:[#allocation2 + $0x50] sm:$0xff] %vm310, %v304
        %322 = vst.msk [vmem:[#allocation2 + $0x58] sm:$0xff] %vm310, %v305
        %323 = vst.msk [vmem:[#allocation2 + $0x60] sm:$0xff] %vm310, %v306
        %324 = vst.msk [vmem:[#allocation2 + $0x68] sm:$0xff] %vm310, %v307
        %325 = vst.msk [vmem:[#allocation2 + $0x70] sm:$0xff] %vm310, %v308
        %326 = vst.msk [vmem:[#allocation2 + $0x78] sm:$0xff] %vm310, %v309
      $region44: #{_analyzer_forward_impl.1} parent=39 // pred_fallthru
        _
      %v327 = vld [vmem:[%s264] sm:$0xff]
      %v328 = vld [vmem:[%s264 + $0x8] sm:$0xff]
      %v329 = vld [vmem:[%s264 + $0x10] sm:$0xff]
      %v330 = vld [vmem:[%s264 + $0x18] sm:$0xff]
      %v331 = vld [vmem:[%s264 + $0x20] sm:$0xff]
      %v332 = vld [vmem:[%s264 + $0x28] sm:$0xff]
      %v333 = vld [vmem:[%s264 + $0x30] sm:$0xff]
      %v334 = vld [vmem:[%s264 + $0x38] sm:$0xff]
      %v335 = vld [vmem:[%s264 + $0x40] sm:$0xff]
      %v336 = vld [vmem:[%s264 + $0x48] sm:$0xff]
      %v337 = vld [vmem:[%s264 + $0x50] sm:$0xff]
      %v338 = vld [vmem:[%s264 + $0x58] sm:$0xff]
      %v339 = vld [vmem:[%s264 + $0x60] sm:$0xff]
      %v340 = vld [vmem:[%s264 + $0x68] sm:$0xff]
      %v341 = vld [vmem:[%s264 + $0x70] sm:$0xff]
      %v342 = vld [vmem:[%s264 + $0x78] sm:$0xff]
      %v343 = vld [vmem:[%s267] sm:$0x1]
      %v344 = vld [vmem:[#allocation2] sm:$0xff]
      %v345 = vld [vmem:[#allocation2 + $0x8] sm:$0xff]
      %v346 = vld [vmem:[#allocation2 + $0x10] sm:$0xff]
      %v347 = vld [vmem:[#allocation2 + $0x18] sm:$0xff]
      %v348 = vld [vmem:[#allocation2 + $0x20] sm:$0xff]
      %v349 = vld [vmem:[#allocation2 + $0x28] sm:$0xff]
      %v350 = vld [vmem:[#allocation2 + $0x30] sm:$0xff]
      %v351 = vld [vmem:[#allocation2 + $0x38] sm:$0xff]
      %v352 = vld [vmem:[#allocation2 + $0x40] sm:$0xff]
      %v353 = vld [vmem:[#allocation2 + $0x48] sm:$0xff]
      %v354 = vld [vmem:[#allocation2 + $0x50] sm:$0xff]
      %v355 = vld [vmem:[#allocation2 + $0x58] sm:$0xff]
      %v356 = vld [vmem:[#allocation2 + $0x60] sm:$0xff]
      %v357 = vld [vmem:[#allocation2 + $0x68] sm:$0xff]
      %v358 = vld [vmem:[#allocation2 + $0x70] sm:$0xff]
      %v359 = vld [vmem:[#allocation2 + $0x78] sm:$0xff]
      %v361 = vperm.slane %v343, 0
      %363 = vmatpush.msra.mxu0 %v342
      %364 = vmatpush.msra.mxu0 %v341
      %365 = vmatpush.msra.mxu0 %v340
      %366 = vmatpush.msra.mxu0 %v339
      %367 = vmatpush.msra.mxu0 %v338
      %368 = vmatpush.msra.mxu0 %v337
      %369 = vmatpush.msra.mxu0 %v336
      %370 = vmatpush.msra.mxu0 %v335
      %371 = vmatpush.msra.mxu0 %v334
      %372 = vmatpush.msra.mxu0 %v333
      %373 = vmatpush.msra.mxu0 %v332
      %374 = vmatpush.msra.mxu0 %v331
      %375 = vmatpush.msra.mxu0 %v330
      %376 = vmatpush.msra.mxu0 %v329
      %377 = vmatpush.msra.mxu0 %v328
      %378 = vmatpush.msra.mxu0 %v327
      %379 = vmatmul.f32.gmra.mxu0 %v344
      %v380 = vpop.f32.mrf.mxu0
      %v381 = vadd.f32 %v361, %v380
      %382 = vmatmul.f32.gmra.mxu0 %v345
      %v383 = vpop.f32.mrf.mxu0
      %v384 = vadd.f32 %v361, %v383
      %385 = vmatmul.f32.gmra.mxu0 %v346
      %v386 = vpop.f32.mrf.mxu0
      %v387 = vadd.f32 %v361, %v386
      %388 = vmatmul.f32.gmra.mxu0 %v347
      %v389 = vpop.f32.mrf.mxu0
      %v390 = vadd.f32 %v361, %v389
      %391 = vmatmul.f32.gmra.mxu0 %v348
      %v392 = vpop.f32.mrf.mxu0
      %v393 = vadd.f32 %v361, %v392
      %394 = vmatmul.f32.gmra.mxu0 %v349
      %v395 = vpop.f32.mrf.mxu0
      %v396 = vadd.f32 %v361, %v395
      %397 = vmatmul.f32.gmra.mxu0 %v350
      %v398 = vpop.f32.mrf.mxu0
      %v399 = vadd.f32 %v361, %v398
      %400 = vmatmul.f32.gmra.mxu0 %v351
      %v401 = vpop.f32.mrf.mxu0
      %v402 = vadd.f32 %v361, %v401
      %403 = vmatmul.f32.gmra.mxu0 %v352
      %v404 = vpop.f32.mrf.mxu0
      %v405 = vadd.f32 %v361, %v404
      %406 = vmatmul.f32.gmra.mxu0 %v353
      %v407 = vpop.f32.mrf.mxu0
      %v408 = vadd.f32 %v361, %v407
      %409 = vmatmul.f32.gmra.mxu0 %v354
      %v410 = vpop.f32.mrf.mxu0
      %v411 = vadd.f32 %v361, %v410
      %412 = vmatmul.f32.gmra.mxu0 %v355
      %v413 = vpop.f32.mrf.mxu0
      %v414 = vadd.f32 %v361, %v413
      %415 = vmatmul.f32.gmra.mxu0 %v356
      %v416 = vpop.f32.mrf.mxu0
      %v417 = vadd.f32 %v361, %v416
      %418 = vmatmul.f32.gmra.mxu0 %v357
      %v419 = vpop.f32.mrf.mxu0
      %v420 = vadd.f32 %v361, %v419
      %421 = vmatmul.f32.gmra.mxu0 %v358
      %v422 = vpop.f32.mrf.mxu0
      %v423 = vadd.f32 %v361, %v422
      %424 = vmatmul.f32.gmra.mxu0 %v359
      %v425 = vpop.f32.mrf.mxu0
      %v426 = vadd.f32 %v361, %v425
      %427 = vdwg.mxu0
      %v428 = vmul.f32 %v381, 0.01
      %v429 = vmul.f32 %v384, 0.01
      %v430 = vmul.f32 %v387, 0.01
      %v431 = vmul.f32 %v390, 0.01
      %v432 = vmul.f32 %v393, 0.01
      %v433 = vmul.f32 %v396, 0.01
      %v434 = vmul.f32 %v399, 0.01
      %v435 = vmul.f32 %v402, 0.01
      %v436 = vmul.f32 %v405, 0.01
      %v437 = vmul.f32 %v408, 0.01
      %v438 = vmul.f32 %v411, 0.01
      %v439 = vmul.f32 %v414, 0.01
      %v440 = vmul.f32 %v417, 0.01
      %v441 = vmul.f32 %v420, 0.01
      %v442 = vmul.f32 %v423, 0.01
      %v443 = vmul.f32 %v426, 0.01
      %v444 = vmax.f32 %v381, %v428
      %v445 = vmax.f32 %v384, %v429
      %v446 = vmax.f32 %v387, %v430
      %v447 = vmax.f32 %v390, %v431
      %v448 = vmax.f32 %v393, %v432
      %v449 = vmax.f32 %v396, %v433
      %v450 = vmax.f32 %v399, %v434
      %v451 = vmax.f32 %v402, %v435
      %v452 = vmax.f32 %v405, %v436
      %v453 = vmax.f32 %v408, %v437
      %v454 = vmax.f32 %v411, %v438
      %v455 = vmax.f32 %v414, %v439
      %v456 = vmax.f32 %v417, %v440
      %v457 = vmax.f32 %v420, %v441
      %v458 = vmax.f32 %v423, %v442
      %v459 = vmax.f32 %v426, %v443
      %v460 = vadd.f32 %v344, %v444
      %v461 = vadd.f32 %v345, %v445
      %v462 = vadd.f32 %v346, %v446
      %v463 = vadd.f32 %v347, %v447
      %v464 = vadd.f32 %v348, %v448
      %v465 = vadd.f32 %v349, %v449
      %v466 = vadd.f32 %v350, %v450
      %v467 = vadd.f32 %v351, %v451
      %v468 = vadd.f32 %v352, %v452
      %v469 = vadd.f32 %v353, %v453
      %v470 = vadd.f32 %v354, %v454
      %v471 = vadd.f32 %v355, %v455
      %v472 = vadd.f32 %v356, %v456
      %v473 = vadd.f32 %v357, %v457
      %v474 = vadd.f32 %v358, %v458
      %v475 = vadd.f32 %v359, %v459
      %476 = vst [vmem:[#allocation2] sm:$0xff] %v460
      %477 = vst [vmem:[#allocation2 + $0x8] sm:$0xff] %v461
      %478 = vst [vmem:[#allocation2 + $0x10] sm:$0xff] %v462
      %479 = vst [vmem:[#allocation2 + $0x18] sm:$0xff] %v463
      %480 = vst [vmem:[#allocation2 + $0x20] sm:$0xff] %v464
      %481 = vst [vmem:[#allocation2 + $0x28] sm:$0xff] %v465
      %482 = vst [vmem:[#allocation2 + $0x30] sm:$0xff] %v466
      %483 = vst [vmem:[#allocation2 + $0x38] sm:$0xff] %v467
      %484 = vst [vmem:[#allocation2 + $0x40] sm:$0xff] %v468
      %485 = vst [vmem:[#allocation2 + $0x48] sm:$0xff] %v469
      %486 = vst [vmem:[#allocation2 + $0x50] sm:$0xff] %v470
      %487 = vst [vmem:[#allocation2 + $0x58] sm:$0xff] %v471
      %488 = vst [vmem:[#allocation2 + $0x60] sm:$0xff] %v472
      %489 = vst [vmem:[#allocation2 + $0x68] sm:$0xff] %v473
      %490 = vst [vmem:[#allocation2 + $0x70] sm:$0xff] %v474
      %491 = vst [vmem:[#allocation2 + $0x78] sm:$0xff] %v475
      // Predicated region
      $region45: #{_analyzer_forward_impl.1} parent=39 // pred_check
        %p492 = pneg %p274
      $region46: #{_analyzer_forward_impl.1} parent=39 // pred_check_branch
        %494 = sbr.rel (%p492) target = $region48
      $region47: #{_analyzer_forward_impl.1} parent=39 // pred_region
        %v495 = vld [vmem:[%s3] sm:$0xff]
        %v496 = vld [vmem:[%s3 + $0x8] sm:$0xff]
        %v497 = vld [vmem:[%s3 + $0x10] sm:$0xff]
        %v498 = vld [vmem:[%s3 + $0x18] sm:$0xff]
        %v499 = vld [vmem:[%s3 + $0x20] sm:$0xff]
        %v500 = vld [vmem:[%s3 + $0x28] sm:$0xff]
        %v501 = vld [vmem:[%s3 + $0x30] sm:$0xff]
        %v502 = vld [vmem:[%s3 + $0x38] sm:$0xff]
        %v503 = vld [vmem:[%s3 + $0x40] sm:$0xff]
        %v504 = vld [vmem:[%s3 + $0x48] sm:$0xff]
        %v505 = vld [vmem:[%s3 + $0x50] sm:$0xff]
        %v506 = vld [vmem:[%s3 + $0x58] sm:$0xff]
        %v507 = vld [vmem:[%s3 + $0x60] sm:$0xff]
        %v508 = vld [vmem:[%s3 + $0x68] sm:$0xff]
        %v509 = vld [vmem:[%s3 + $0x70] sm:$0xff]
        %v510 = vld [vmem:[%s3 + $0x78] sm:$0xff]
        %v511 = vld [vmem:[%s4] sm:$0x1]
        %v513 = vperm.slane %v511, 0
        %515 = vmatpush.msra.mxu0 %v510
        %516 = vmatpush.msra.mxu0 %v509
        %517 = vmatpush.msra.mxu0 %v508
        %518 = vmatpush.msra.mxu0 %v507
        %519 = vmatpush.msra.mxu0 %v506
        %520 = vmatpush.msra.mxu0 %v505
        %521 = vmatpush.msra.mxu0 %v504
        %522 = vmatpush.msra.mxu0 %v503
        %523 = vmatpush.msra.mxu0 %v502
        %524 = vmatpush.msra.mxu0 %v501
        %525 = vmatpush.msra.mxu0 %v500
        %526 = vmatpush.msra.mxu0 %v499
        %527 = vmatpush.msra.mxu0 %v498
        %528 = vmatpush.msra.mxu0 %v497
        %529 = vmatpush.msra.mxu0 %v496
        %530 = vmatpush.msra.mxu0 %v495
        %531 = vmatmul.f32.gmra.mxu0 %v460
        %v532 = vpop.f32.mrf.mxu0
        %v533 = vadd.f32 %v513, %v532
        %534 = vmatmul.f32.gmra.mxu0 %v461
        %v535 = vpop.f32.mrf.mxu0
        %v536 = vadd.f32 %v513, %v535
        %537 = vmatmul.f32.gmra.mxu0 %v462
        %v538 = vpop.f32.mrf.mxu0
        %v539 = vadd.f32 %v513, %v538
        %540 = vmatmul.f32.gmra.mxu0 %v463
        %v541 = vpop.f32.mrf.mxu0
        %v542 = vadd.f32 %v513, %v541
        %543 = vmatmul.f32.gmra.mxu0 %v464
        %v544 = vpop.f32.mrf.mxu0
        %v545 = vadd.f32 %v513, %v544
        %546 = vmatmul.f32.gmra.mxu0 %v465
        %v547 = vpop.f32.mrf.mxu0
        %v548 = vadd.f32 %v513, %v547
        %549 = vmatmul.f32.gmra.mxu0 %v466
        %v550 = vpop.f32.mrf.mxu0
        %v551 = vadd.f32 %v513, %v550
        %552 = vmatmul.f32.gmra.mxu0 %v467
        %v553 = vpop.f32.mrf.mxu0
        %v554 = vadd.f32 %v513, %v553
        %555 = vmatmul.f32.gmra.mxu0 %v468
        %v556 = vpop.f32.mrf.mxu0
        %v557 = vadd.f32 %v513, %v556
        %558 = vmatmul.f32.gmra.mxu0 %v469
        %v559 = vpop.f32.mrf.mxu0
        %v560 = vadd.f32 %v513, %v559
        %561 = vmatmul.f32.gmra.mxu0 %v470
        %v562 = vpop.f32.mrf.mxu0
        %v563 = vadd.f32 %v513, %v562
        %564 = vmatmul.f32.gmra.mxu0 %v471
        %v565 = vpop.f32.mrf.mxu0
        %v566 = vadd.f32 %v513, %v565
        %567 = vmatmul.f32.gmra.mxu0 %v472
        %v568 = vpop.f32.mrf.mxu0
        %v569 = vadd.f32 %v513, %v568
        %570 = vmatmul.f32.gmra.mxu0 %v473
        %v571 = vpop.f32.mrf.mxu0
        %v572 = vadd.f32 %v513, %v571
        %573 = vmatmul.f32.gmra.mxu0 %v474
        %v574 = vpop.f32.mrf.mxu0
        %v575 = vadd.f32 %v513, %v574
        %576 = vmatmul.f32.gmra.mxu0 %v475
        %v577 = vpop.f32.mrf.mxu0
        %v578 = vadd.f32 %v513, %v577
        %579 = vdwg.mxu0
        %580 = vst [vmem:[%s272] sm:$0xff] %v533
        %581 = vst [vmem:[%s272 + $0x8] sm:$0xff] %v536
        %582 = vst [vmem:[%s272 + $0x10] sm:$0xff] %v539
        %583 = vst [vmem:[%s272 + $0x18] sm:$0xff] %v542
        %584 = vst [vmem:[%s272 + $0x20] sm:$0xff] %v545
        %585 = vst [vmem:[%s272 + $0x28] sm:$0xff] %v548
        %586 = vst [vmem:[%s272 + $0x30] sm:$0xff] %v551
        %587 = vst [vmem:[%s272 + $0x38] sm:$0xff] %v554
        %588 = vst [vmem:[%s272 + $0x40] sm:$0xff] %v557
        %589 = vst [vmem:[%s272 + $0x48] sm:$0xff] %v560
        %590 = vst [vmem:[%s272 + $0x50] sm:$0xff] %v563
        %591 = vst [vmem:[%s272 + $0x58] sm:$0xff] %v566
        %592 = vst [vmem:[%s272 + $0x60] sm:$0xff] %v569
        %593 = vst [vmem:[%s272 + $0x68] sm:$0xff] %v572
        %594 = vst [vmem:[%s272 + $0x70] sm:$0xff] %v575
        %595 = vst [vmem:[%s272 + $0x78] sm:$0xff] %v578
      $region48: #{_analyzer_forward_impl.1} parent=39 // pred_fallthru
        _
      %s596 = smul.u32 16, %s20
      %p597 = scmp.lt.s32.totalorder %s596, 63
      %s598 = scalar_select %p597, %s596, 63
      %s599 = smul.addr %s598, 8
      %s600 = scalar_lea.vmem %s5, %s599
      // Predicated region
      $region49: #{_analyzer_forward_impl.1} parent=39 // pred_check
        %p601 = pneg %p166
      $region50: #{_analyzer_forward_impl.1} parent=39 // pred_check_branch
        %603 = sbr.rel (%p601) target = $region52
      $region51: #{_analyzer_forward_impl.1} parent=39 // pred_region
        %s604 = smul.u32 16, %s20
      $region52: #{_analyzer_forward_impl.1} parent=39 // pred_fallthru
        _
    $region40: #{_analyzer_forward_impl.1} parent=5 // pred_fallthru
      _
    %p605 = scmp.le.s32.totalorder 2, %s11
    // Predicated region
    $region53: #{_analyzer_forward_impl.1} parent=5 // pred_check
      %p606 = pneg %p605
    $region54: #{_analyzer_forward_impl.1} parent=5 // pred_check_branch
      %608 = sbr.rel (%p606) target = $region56
    $region55: #{_analyzer_forward_impl.1} parent=5 // pred_region
      %s609 = ssub.s32 %s11, 2
      // Predicated region
      $region57: #{_analyzer_forward_impl.1} parent=55 // pred_check
        %p610 = pneg %p172
      $region58: #{_analyzer_forward_impl.1} parent=55 // pred_check_branch
        %612 = sbr.rel (%p610) target = $region60
      $region59: #{_analyzer_forward_impl.1} parent=55 // pred_region
        %s613 = smul.u32 16, %s22
        %p614 = scmp.lt.s32.totalorder %s613, 63
        %s615 = scalar_select %p614, %s613, 63
        %s616 = smul.addr %s615, 8
        %s617 = scalar_lea.vmem %s5, %s616
      $region60: #{_analyzer_forward_impl.1} parent=55 // pred_fallthru
        _
    $region56: #{_analyzer_forward_impl.1} parent=5 // pred_fallthru
      _
  $region6: #{_analyzer_forward_impl.1} parent=0 // loop_footer
    %s15 = sadd.s32 1, %s11
  $region7: #{_analyzer_forward_impl.1} parent=0 // loop_footer_branch
    %10 = sbr.rel target = $region3
  $region8: #{_analyzer_forward_impl.1} parent=0 // loop_exit
    _

</llo_original>
